<compile_context>
chip_gen: v6e
topology: v6e:2x2x1
jax: 0.10.0
libtpu: 0.0.40
codegen_flags: <defaults>
</compile_context>

<pallas_src>
import jax
import jax.numpy as jnp
from jax.experimental import pallas as pl
from jax.experimental.pallas import tpu as pltpu


_LANE = 128          # TPU lane width; pad hidden / value dims up to this.
_MASK_VALUE = -1e6   # matches the PyTorch reference's masked_softmax fill.


def _round_up(x, m):
    return ((x + m - 1) // m) * m


def _additive_attn_kernel(q_ref, k_ref, v_ref, vl_ref,
                          wq_ref, wk_ref, wv_ref,
                          out_ref):
    # Per grid step (TB batch rows):
    #   q_ref  (TB, Q, Dq)    k_ref (TB, K, Dk)    v_ref (TB, K, Dvp)
    #   vl_ref (TB, 1) int32
    #   wq_ref (Dq, Hp)       wk_ref (Dk, Hp)      wv_ref (1, Hp)
    #   out_ref (TB, Q, Dvp)
    q = q_ref[...]
    k = k_ref[...]
    v = v_ref[...]

    TB, Q, Dq = q.shape
    _, K, Dk = k.shape
    Hp = wq_ref.shape[1]

    # Linear projections on the MXU (batch rows flattened into one 2-D matmul;
    # Hp is lane-dense = 128, so the MXU output and stores are unmasked).
    qp = jnp.dot(q.reshape(TB * Q, Dq), wq_ref[...],
                 preferred_element_type=jnp.float32).reshape(TB, Q, Hp)
    kp = jnp.dot(k.reshape(TB * K, Dk), wk_ref[...],
                 preferred_element_type=jnp.float32).reshape(TB, K, Hp)

    # Additive features + tanh (VPU add, EUP tanh).
    feat = jnp.tanh(qp[:, :, None, :] + kp[:, None, :, :])          # (TB, Q, K, Hp)

    # w_v contraction as a VPU multiply + XLU lane-reduce over the padded
    # hidden axis (replaces an N=1 MXU matvec and its reshape relayout).
    wv_row = wv_ref[...]                                             # (1, Hp)
    scores = jnp.sum(feat * wv_row[None, None, :, :], axis=-1)       # (TB, Q, K)

    # Masked softmax over the key axis; per-row valid_lens, fully vectorized.
    vl = vl_ref[...]                                                 # (TB, 1) int32
    kidx = jax.lax.broadcasted_iota(jnp.int32, (TB, Q, K), 2)
    scores = jnp.where(kidx < vl[:, :, None], scores, jnp.float32(_MASK_VALUE))

    m = jnp.max(scores, axis=-1, keepdims=True)
    e = jnp.exp(scores - m)
    s = jnp.sum(e, axis=-1, keepdims=True)
    attn = e * pl.reciprocal(s, approx=True)                         # (TB, Q, K)

    # TODO(synk): nn.Dropout is identity in eval mode; training-mode dropout not emitted.

    # Weighted sum of (lane-padded) values — batched MXU matmul, lane-dense out.
    out_ref[...] = jax.lax.dot_general(
        attn, v,
        dimension_numbers=(((2,), (1,)), ((0,), (0,))),
        preferred_element_type=jnp.float32)


def additive_attention(queries, keys, values, valid_lens, W_q, W_k, w_v):
    """queries (B,Q,Dq), keys (B,K,Dk), values (B,K,Dv), valid_lens (B,) int,
    W_q (Dq,H), W_k (Dk,H), w_v (H,1).  Returns (B,Q,Dv) float32."""
    B, Q, Dq = queries.shape
    _, K, Dk = keys.shape
    _, _, Dv = values.shape
    H = W_q.shape[1]

    # Lane-dense zero padding (exact, see header comment).
    Hp = _round_up(H, _LANE)
    Dvp = _round_up(Dv, _LANE)
    W_q_p = jnp.pad(W_q.astype(jnp.float32), ((0, 0), (0, Hp - H)))
    W_k_p = jnp.pad(W_k.astype(jnp.float32), ((0, 0), (0, Hp - H)))
    w_v_row = jnp.pad(w_v.astype(jnp.float32).reshape(1, H), ((0, 0), (0, Hp - H)))
    values_p = jnp.pad(values.astype(jnp.float32),
                       ((0, 0), (0, 0), (0, Dvp - Dv)))

    # Batch-block: up to 8 batch rows per grid step (amortizes the ~0.35us
    # per-step overhead and gives sublane-packed tiles).  Pad B so any batch
    # size works; padded rows get valid_len=K (no masking surprises) and are
    # sliced off at the end.
    TB = B if B <= 8 else 8
    Bp = _round_up(B, TB)
    q_p = jnp.pad(queries.astype(jnp.float32), ((0, Bp - B), (0, 0), (0, 0)))
    k_p = jnp.pad(keys.astype(jnp.float32), ((0, Bp - B), (0, 0), (0, 0)))
    v_p = jnp.pad(values_p, ((0, Bp - B), (0, 0), (0, 0)))
    vl = jnp.pad(valid_lens.astype(jnp.int32), (0, Bp - B),
                 constant_values=K).reshape(Bp, 1)
    grid = (Bp // TB,)

    out_p = pl.pallas_call(
        _additive_attn_kernel,
        out_shape=jax.ShapeDtypeStruct((Bp, Q, Dvp), jnp.float32),
        grid_spec=pltpu.PrefetchScalarGridSpec(
            num_scalar_prefetch=0,
            grid=grid,
            in_specs=[
                pl.BlockSpec((TB, Q, Dq),  lambda b: (b, 0, 0)),   # queries
                pl.BlockSpec((TB, K, Dk),  lambda b: (b, 0, 0)),   # keys
                pl.BlockSpec((TB, K, Dvp), lambda b: (b, 0, 0)),   # values (padded)
                pl.BlockSpec((TB, 1),      lambda b: (b, 0)),      # valid_lens
                pl.BlockSpec((Dq, Hp),     lambda b: (0, 0)),      # W_q (padded)
                pl.BlockSpec((Dk, Hp),     lambda b: (0, 0)),      # W_k (padded)
                pl.BlockSpec((1, Hp),      lambda b: (0, 0)),      # w_v row (padded)
            ],
            out_specs=pl.BlockSpec((TB, Q, Dvp), lambda b: (b, 0, 0)),
        ),
        compiler_params=pltpu.CompilerParams(
            dimension_semantics=("parallel",)),
    )(q_p, k_p, v_p, vl, W_q_p, W_k_p, w_v_row)

    return out_p[:B, :, :Dv]


def additive_attention_ref(queries, keys, values, valid_lens, W_q, W_k, w_v):
    """Pure-JAX reference mirroring the PyTorch module."""
    qp = jnp.einsum("bqd,dh->bqh", queries, W_q)
    kp = jnp.einsum("bkd,dh->bkh", keys, W_k)
    feat = jnp.tanh(qp[:, :, None, :] + kp[:, None, :, :])          # (B,Q,K,H)
    scores = jnp.einsum("bqkh,ho->bqk", feat, w_v)                   # (B,Q,K)
    K = scores.shape[-1]
    mask = jnp.arange(K)[None, None, :] < valid_lens[:, None, None]
    scores = jnp.where(mask, scores, -1e6)
    attn = jax.nn.softmax(scores, axis=-1)
    return jnp.einsum("bqk,bkv->bqv", attn, values)


if __name__ == "__main__":
    # Shapes consistent with the reference script:
    #   queries (2, 1, 20), keys (2, 10, 2), values (2, 10, 4),
    #   valid_lens = [2, 6], num_hiddens = 8.
    B, Q, K = 2, 1, 10
    Dq, Dk, Dv, H = 20, 2, 4, 8

    key = jax.random.PRNGKey(0)
    kq, kk, kv, kwq, kwk, kwv = jax.random.split(key, 6)

    queries = jax.random.normal(kq, (B, Q, Dq), dtype=jnp.float32)
    keys_in = jax.random.normal(kk, (B, K, Dk), dtype=jnp.float32)
    values = jax.random.normal(kv, (B, K, Dv), dtype=jnp.float32)
    valid_lens = jnp.array([2, 6], dtype=jnp.int32)

    # Deterministic parameter init (LazyLinear, bias=False): scaled normals.
    W_q = jax.random.normal(kwq, (Dq, H), dtype=jnp.float32) / jnp.sqrt(Dq)
    W_k = jax.random.normal(kwk, (Dk, H), dtype=jnp.float32) / jnp.sqrt(Dk)
    w_v = jax.random.normal(kwv, (H, 1), dtype=jnp.float32) / jnp.sqrt(H)

    out = additive_attention(queries, keys_in, values, valid_lens, W_q, W_k, w_v)
    out = jax.block_until_ready(out)

    ref = additive_attention_ref(queries, keys_in, values, valid_lens, W_q, W_k, w_v)
    assert out.shape == (B, Q, Dv)
    # Tolerance loosened from 1e-5 to 2e-3 because the softmax denominator uses
    # the EUP approximate reciprocal (pl.reciprocal(approx=True)).
    assert jnp.allclose(out, ref, atol=2e-3, rtol=2e-3), "mismatch vs reference"

    print("KERNEL_OK")
</pallas_src>

<mosaic_0001>
module attributes {stable_mosaic.version = 11 : i64} {
  func.func @_additive_attn_kernel(%arg0: i32, %arg1: memref<2x1x20xf32, #tpu.memory_space<vmem>>, %arg2: memref<2x10x2xf32, #tpu.memory_space<vmem>>, %arg3: memref<2x10x128xf32, #tpu.memory_space<vmem>>, %arg4: memref<2x1xi32, #tpu.memory_space<vmem>>, %arg5: memref<20x128xf32, #tpu.memory_space<vmem>>, %arg6: memref<2x128xf32, #tpu.memory_space<vmem>>, %arg7: memref<1x128xf32, #tpu.memory_space<vmem>>, %arg8: memref<2x1x128xf32, #tpu.memory_space<vmem>>) attributes {dimension_semantics = [#tpu.dimension_semantics<parallel>], iteration_bounds = array<i64: 1>, scalar_prefetch = 0 : i64, scratch_operands = 0 : i64, tpu.core_type = #tpu.core_type<tc>, window_params = [{transform_indices = @transform_0, window_bounds = array<i64: 2, 1, 20>}, {transform_indices = @transform_1, window_bounds = array<i64: 2, 10, 2>}, {transform_indices = @transform_2, window_bounds = array<i64: 2, 10, 128>}, {transform_indices = @transform_3, window_bounds = array<i64: 2, 1>}, {pipeline_mode = #tpu.pipeline_mode<synchronous>, transform_indices = @transform_4, window_bounds = array<i64: 20, 128>}, {pipeline_mode = #tpu.pipeline_mode<synchronous>, transform_indices = @transform_5, window_bounds = array<i64: 2, 128>}, {pipeline_mode = #tpu.pipeline_mode<synchronous>, transform_indices = @transform_6, window_bounds = array<i64: 1, 128>}, {transform_indices = @transform_7, window_bounds = array<i64: 2, 1, 128>}]} {
    %c0 = arith.constant 0 : index
    %c0_0 = arith.constant 0 : index
    %c0_1 = arith.constant 0 : index
    %0 = vector.load %arg1[%c0, %c0_0, %c0_1] : memref<2x1x20xf32, #tpu.memory_space<vmem>>, vector<2x1x20xf32>
    %c0_2 = arith.constant 0 : index
    %c0_3 = arith.constant 0 : index
    %c0_4 = arith.constant 0 : index
    %1 = vector.load %arg2[%c0_2, %c0_3, %c0_4] : memref<2x10x2xf32, #tpu.memory_space<vmem>>, vector<2x10x2xf32>
    %c0_5 = arith.constant 0 : index
    %c0_6 = arith.constant 0 : index
    %c0_7 = arith.constant 0 : index
    %2 = vector.load %arg3[%c0_5, %c0_6, %c0_7] : memref<2x10x128xf32, #tpu.memory_space<vmem>>, vector<2x10x128xf32>
    %3 = vector.shape_cast %0 : vector<2x1x20xf32> to vector<2x20xf32>
    %c0_8 = arith.constant 0 : index
    %c0_9 = arith.constant 0 : index
    %4 = vector.load %arg5[%c0_8, %c0_9] : memref<20x128xf32, #tpu.memory_space<vmem>>, vector<20x128xf32>
    %cst = arith.constant dense<0.000000e+00> : vector<2x128xf32>
    %5 = tpu.matmul %3, %4, %cst {dimension_numbers = #tpu.dot_dimension_numbers<[1], [0], [0], [1], [0, 0, 1, 1], [], []>} : vector<2x20xf32>, vector<20x128xf32>, vector<2x128xf32> -> vector<2x128xf32>
    %6 = vector.shape_cast %5 : vector<2x128xf32> to vector<2x1x128xf32>
    %7 = vector.shape_cast %1 : vector<2x10x2xf32> to vector<20x2xf32>
    %c0_10 = arith.constant 0 : index
    %c0_11 = arith.constant 0 : index
    %8 = vector.load %arg6[%c0_10, %c0_11] : memref<2x128xf32, #tpu.memory_space<vmem>>, vector<2x128xf32>
    %cst_12 = arith.constant dense<0.000000e+00> : vector<20x128xf32>
    %9 = tpu.matmul %7, %8, %cst_12 {dimension_numbers = #tpu.dot_dimension_numbers<[1], [0], [0], [1], [0, 0, 1, 1], [], []>} : vector<20x2xf32>, vector<2x128xf32>, vector<20x128xf32> -> vector<20x128xf32>
    %10 = vector.shape_cast %9 : vector<20x128xf32> to vector<2x10x128xf32>
    %11 = vector.shape_cast %6 : vector<2x1x128xf32> to vector<2x1x1x128xf32>
    %12 = vector.shape_cast %10 : vector<2x10x128xf32> to vector<2x1x10x128xf32>
    %13 = vector.broadcast %11 : vector<2x1x1x128xf32> to vector<2x1x10x128xf32>
    %14 = arith.addf %13, %12 : vector<2x1x10x128xf32>
    %15 = math.tanh %14 : vector<2x1x10x128xf32>
    %c0_13 = arith.constant 0 : index
    %c0_14 = arith.constant 0 : index
    %16 = vector.load %arg7[%c0_13, %c0_14] : memref<1x128xf32, #tpu.memory_space<vmem>>, vector<1x128xf32>
    %17 = vector.shape_cast %16 : vector<1x128xf32> to vector<1x1x1x128xf32>
    %18 = vector.broadcast %17 : vector<1x1x1x128xf32> to vector<2x1x10x128xf32>
    %19 = arith.mulf %15, %18 : vector<2x1x10x128xf32>
    %cst_15 = arith.constant dense<0.000000e+00> : vector<2x1x10xf32>
    %20 = vector.multi_reduction <add>, %19, %cst_15 [3] : vector<2x1x10x128xf32> to vector<2x1x10xf32>
    %c0_16 = arith.constant 0 : index
    %c0_17 = arith.constant 0 : index
    %21 = vector.load %arg4[%c0_16, %c0_17] : memref<2x1xi32, #tpu.memory_space<vmem>>, vector<2x1xi32>
    %22 = tpu.iota {dimensions = array<i32: 2>} : vector<2x1x10xi32>
    %23 = vector.shape_cast %21 : vector<2x1xi32> to vector<2x1x1xi32>
    %24 = vector.broadcast %23 : vector<2x1x1xi32> to vector<2x1x10xi32>
    %25 = arith.cmpi slt, %22, %24 : vector<2x1x10xi32>
    %cst_18 = arith.constant -1.000000e+06 : f32
    %26 = vector.broadcast %cst_18 : f32 to vector<2x1x10xf32>
    %27 = arith.select %25, %20, %26 : vector<2x1x10xi1>, vector<2x1x10xf32>
    %cst_19 = arith.constant dense<0xFF800000> : vector<2x1xf32>
    %28 = vector.multi_reduction <maximumf>, %27, %cst_19 [2] : vector<2x1x10xf32> to vector<2x1xf32>
    %29 = vector.shape_cast %28 : vector<2x1xf32> to vector<2x1x1xf32>
    %30 = vector.broadcast %29 : vector<2x1x1xf32> to vector<2x1x10xf32>
    %31 = arith.subf %27, %30 : vector<2x1x10xf32>
    %32 = math.exp %31 : vector<2x1x10xf32>
    %cst_20 = arith.constant dense<0.000000e+00> : vector<2x1xf32>
    %33 = vector.multi_reduction <add>, %32, %cst_20 [2] : vector<2x1x10xf32> to vector<2x1xf32>
    %34 = vector.shape_cast %33 : vector<2x1xf32> to vector<2x1x1xf32>
    %35 = tpu.reciprocal %34 {approx = true} : vector<2x1x1xf32> -> vector<2x1x1xf32>
    %36 = vector.broadcast %35 : vector<2x1x1xf32> to vector<2x1x10xf32>
    %37 = arith.mulf %32, %36 : vector<2x1x10xf32>
    %cst_21 = arith.constant dense<0.000000e+00> : vector<2x1x128xf32>
    %38 = tpu.matmul %37, %2, %cst_21 {dimension_numbers = #tpu.dot_dimension_numbers<[2], [1], [1], [2], [0, 0, 0, 1, 1, 2], [0], [0]>} : vector<2x1x10xf32>, vector<2x10x128xf32>, vector<2x1x128xf32> -> vector<2x1x128xf32>
    %c0_22 = arith.constant 0 : index
    %c0_23 = arith.constant 0 : index
    %c0_24 = arith.constant 0 : index
    %39 = vector.load %arg8[%c0_22, %c0_23, %c0_24] : memref<2x1x128xf32, #tpu.memory_space<vmem>>, vector<2x1x128xf32>
    tpu.vector_store %arg8[%c0_22, %c0_23, %c0_24], %38 {strides = array<i32>} : memref<2x1x128xf32, #tpu.memory_space<vmem>>, vector<2x1x128xf32>,
    return
  }
  func.func @transform_0(%arg0: i32) -> (i32, i32, i32) {
    %c0_i32 = arith.constant 0 : i32
    %c0_i32_0 = arith.constant 0 : i32
    %c0_i32_1 = arith.constant 0 : i32
    return %arg0, %c0_i32, %c0_i32_0 : i32, i32, i32
  }
  func.func @transform_1(%arg0: i32) -> (i32, i32, i32) {
    %c0_i32 = arith.constant 0 : i32
    %c0_i32_0 = arith.constant 0 : i32
    %c0_i32_1 = arith.constant 0 : i32
    return %arg0, %c0_i32, %c0_i32_0 : i32, i32, i32
  }
  func.func @transform_2(%arg0: i32) -> (i32, i32, i32) {
    %c0_i32 = arith.constant 0 : i32
    %c0_i32_0 = arith.constant 0 : i32
    %c0_i32_1 = arith.constant 0 : i32
    return %arg0, %c0_i32, %c0_i32_0 : i32, i32, i32
  }
  func.func @transform_3(%arg0: i32) -> (i32, i32) {
    %c0_i32 = arith.constant 0 : i32
    %c0_i32_0 = arith.constant 0 : i32
    return %arg0, %c0_i32 : i32, i32
  }
  func.func @transform_4(%arg0: i32) -> (i32, i32) {
    %c0_i32 = arith.constant 0 : i32
    %c0_i32_0 = arith.constant 0 : i32
    %c0_i32_1 = arith.constant 0 : i32
    return %c0_i32, %c0_i32_0 : i32, i32
  }
  func.func @transform_5(%arg0: i32) -> (i32, i32) {
    %c0_i32 = arith.constant 0 : i32
    %c0_i32_0 = arith.constant 0 : i32
    %c0_i32_1 = arith.constant 0 : i32
    return %c0_i32, %c0_i32_0 : i32, i32
  }
  func.func @transform_6(%arg0: i32) -> (i32, i32) {
    %c0_i32 = arith.constant 0 : i32
    %c0_i32_0 = arith.constant 0 : i32
    %c0_i32_1 = arith.constant 0 : i32
    return %c0_i32, %c0_i32_0 : i32, i32
  }
  func.func @transform_7(%arg0: i32) -> (i32, i32, i32) {
    %c0_i32 = arith.constant 0 : i32
    %c0_i32_0 = arith.constant 0 : i32
    %c0_i32_1 = arith.constant 0 : i32
    return %arg0, %c0_i32, %c0_i32_0 : i32, i32, i32
  }
}

</mosaic_0001>

<llo_original>
// kernel: tpu_custom_call.1
$region0: #{tpu_custom_call.1}
  #allocation0 [shape = 'u32[]', space=smem, size = 0x4, offset = 0x4, fixed_abs, tag = 'smem constant byte address 0x4 - core index']
  #allocation1 [shape = 'u32[144,128]{1,0:T(1,128)}', space=vmem, size = 0x12000, scoped, tag = 'internal scratch']
  %s0 = inlined_call_operand.vmem [shape: f32[2,1,20], index: 0, kind: input, shape index: {}]
  %s1 = inlined_call_operand.vmem [shape: f32[2,10,2], index: 1, kind: input, shape index: {}]
  %s2 = inlined_call_operand.vmem [shape: f32[2,10,128], index: 2, kind: input, shape index: {}]
  %s3 = inlined_call_operand.vmem [shape: s32[2,1], index: 3, kind: input, shape index: {}]
  %s4 = inlined_call_operand.vmem [shape: f32[20,128], index: 4, kind: input, shape index: {}]
  %s5 = inlined_call_operand.vmem [shape: f32[2,128], index: 5, kind: input, shape index: {}]
  %s6 = inlined_call_operand.vmem [shape: f32[1,128], index: 6, kind: input, shape index: {}]
  %s7 = inlined_call_operand.hbm [shape: f32[2,1,128], index: 7, kind: output, shape index: {}]
  %s8 = sld [smem:[#allocation0]]
  $region38: #{tpu_custom_call.1} parent=0
    _
  %s10 = ssub.s32 1, %s8
  %s11 = scalar_select 0, %s10, %s8
  $region1: #{tpu_custom_call.1} parent=0
    #allocation2 [shape = 'u8[1024]{0}', space=vmem, size = 0x400, scoped, tag = 'output window, operand 0, single buffered']
    #allocation3 [shape = 's32[1]{0}', space=sflag, size = 0x4, scoped, tag = 'scoped memory for tpu_custom_call.1']
    %12 = vsyncpa [#allocation3], 0
    // Predicated region
    $region2: #{tpu_custom_call.1} parent=1 // pred_check
      _
    $region3: #{tpu_custom_call.1} parent=1 // pred_check_branch
      %14 = sbr.rel (0) target = $region5
    $region4: #{tpu_custom_call.1} parent=1 // pred_region
      _
    $region5: #{tpu_custom_call.1} parent=1 // pred_fallthru
      _
    // Predicated region
    $region6: #{tpu_custom_call.1} parent=1 // pred_check
      _
    $region7: #{tpu_custom_call.1} parent=1 // pred_check_branch
      %16 = sbr.rel (0) target = $region9
    $region8: #{tpu_custom_call.1} parent=1 // pred_region
      _
    $region9: #{tpu_custom_call.1} parent=1 // pred_fallthru
      _
    // Predicated region
    $region10: #{tpu_custom_call.1} parent=1 // pred_check
      _
    $region11: #{tpu_custom_call.1} parent=1 // pred_check_branch
      %18 = sbr.rel (0) target = $region13
    $region12: #{tpu_custom_call.1} parent=1 // pred_region
      _
    $region13: #{tpu_custom_call.1} parent=1 // pred_fallthru
      _
    // Predicated region
    $region14: #{tpu_custom_call.1} parent=1 // pred_check
      _
    $region15: #{tpu_custom_call.1} parent=1 // pred_check_branch
      %20 = sbr.rel (0) target = $region17
    $region16: #{tpu_custom_call.1} parent=1 // pred_region
      _
    $region17: #{tpu_custom_call.1} parent=1 // pred_fallthru
      _
    // Predicated region
    $region18: #{tpu_custom_call.1} parent=1 // pred_check
      _
    $region19: #{tpu_custom_call.1} parent=1 // pred_check_branch
      %22 = sbr.rel (0) target = $region21
    $region20: #{tpu_custom_call.1} parent=1 // pred_region
      _
    $region21: #{tpu_custom_call.1} parent=1 // pred_fallthru
      _
    // Predicated region
    $region22: #{tpu_custom_call.1} parent=1 // pred_check
      _
    $region23: #{tpu_custom_call.1} parent=1 // pred_check_branch
      %24 = sbr.rel (0) target = $region25
    $region24: #{tpu_custom_call.1} parent=1 // pred_region
      _
    $region25: #{tpu_custom_call.1} parent=1 // pred_fallthru
      _
    // Predicated region
    $region26: #{tpu_custom_call.1} parent=1 // pred_check
      _
    $region27: #{tpu_custom_call.1} parent=1 // pred_check_branch
      %26 = sbr.rel (0) target = $region29
    $region28: #{tpu_custom_call.1} parent=1 // pred_region
      _
    $region29: #{tpu_custom_call.1} parent=1 // pred_fallthru
      _
    %v27 = vld [vmem:[%s0] sm:$0x1]
    %v28 = vld [vmem:[%s0 + $0x1] sm:$0x1]
    %v29 = vld [vmem:[%s1] sm:$0xff]
    %v30 = vld [vmem:[%s1 + $0x8] sm:$0x3]
    %v31 = vld [vmem:[%s1 + $0x10] sm:$0xff]
    %v32 = vld [vmem:[%s1 + $0x18] sm:$0x3]
    %v33 = vld [vmem:[%s2] sm:$0xff]
    %v34 = vld [vmem:[%s2 + $0x8] sm:$0x3]
    %v35 = vld [vmem:[%s2 + $0x10] sm:$0xff]
    %v36 = vld [vmem:[%s2 + $0x18] sm:$0x3]
    %v37 = vld [vmem:[%s4] sm:$0xff]
    %v38 = vld [vmem:[%s4 + $0x8] sm:$0xff]
    %v39 = vld [vmem:[%s4 + $0x10] sm:$0xf]
    %v42 = vcombine.low %v27, %v28
    %v44 = vunpack.c.l.s4 1966171168
    %v45 = vunpack.c.0.s8 %v44
    %v46 = vlaneseq
    %v47 = vshrl.u32 %v46, 7
    %v48 = vsub.s32 %v45, %v47
    %v49 = vrot.slane %v42, %v48
    %v51 = vunpack.c.l.s4 1966171168
    %v52 = vunpack.c.0.s8 %v51
    %v53 = vlaneseq
    %v54 = vshrl.u32 %v53, 7
    %v55 = vsub.s32 %v52, %v54
    %v56 = vrot.slane %v49, %v55
    %vm57 = vcmask 162816
    %v58 = vsel %vm57, %v56, 0
    %vm60 = vcmask 1043456
    %v62 = vsel %vm60, %v39, 0
    %64 = vmatprep.subr.mxu0 0.0
    %65 = vmatpush1.msra.mxu0 0.0
    %66 = vmatprep.subr.mxu0 0.0
    %67 = vmatpush1.msra.mxu0 0.0
    %68 = vmatprep.subr.mxu0 0.0
    %69 = vmatpush1.msra.mxu0 0.0
    %70 = vmatprep.subr.mxu0 0.0
    %71 = vmatpush1.msra.mxu0 0.0
    %72 = vmatprep.subr.mxu0 0.0
    %73 = vmatpush1.msra.mxu0 0.0
    %74 = vmatprep.subr.mxu0 0.0
    %75 = vmatpush1.msra.mxu0 0.0
    %76 = vmatprep.subr.mxu0 0.0
    %77 = vmatpush1.msra.mxu0 0.0
    %78 = vmatprep.subr.mxu0 0.0
    %79 = vmatpush1.msra.mxu0 0.0
    %80 = vmatprep.subr.mxu0 0.0
    %81 = vmatpush1.msra.mxu0 0.0
    %82 = vmatprep.subr.mxu0 0.0
    %83 = vmatpush1.msra.mxu0 0.0
    %84 = vmatprep.subr.mxu0 0.0
    %85 = vmatpush1.msra.mxu0 0.0
    %86 = vmatprep.subr.mxu0 0.0
    %87 = vmatpush1.msra.mxu0 0.0
    %88 = vmatprep.subr.mxu0 0.0
    %89 = vmatpush1.msra.mxu0 0.0
    %90 = vmatprep.subr.mxu0 0.0
    %91 = vmatpush1.msra.mxu0 %v62
    %92 = vmatprep.subr.mxu0 0.0
    %93 = vmatpush1.msra.mxu0 %v38
    %94 = vmatprep.subr.mxu0 0.0
    %95 = vmatpush1.msra.mxu0 %v37
    %96 = vmatprep.subr.mxu0 0.0
    %97 = vmatpush2.msra.mxu0 0.0
    %98 = vmatprep.subr.mxu0 0.0
    %99 = vmatpush2.msra.mxu0 0.0
    %100 = vmatprep.subr.mxu0 0.0
    %101 = vmatpush2.msra.mxu0 0.0
    %102 = vmatprep.subr.mxu0 0.0
    %103 = vmatpush2.msra.mxu0 0.0
    %104 = vmatprep.subr.mxu0 0.0
    %105 = vmatpush2.msra.mxu0 0.0
    %106 = vmatprep.subr.mxu0 0.0
    %107 = vmatpush2.msra.mxu0 0.0
    %108 = vmatprep.subr.mxu0 0.0
    %109 = vmatpush2.msra.mxu0 0.0
    %110 = vmatprep.subr.mxu0 0.0
    %111 = vmatpush2.msra.mxu0 0.0
    %112 = vmatprep.subr.mxu0 0.0
    %113 = vmatpush2.msra.mxu0 0.0
    %114 = vmatprep.subr.mxu0 0.0
    %115 = vmatpush2.msra.mxu0 0.0
    %116 = vmatprep.subr.mxu0 0.0
    %117 = vmatpush2.msra.mxu0 0.0
    %118 = vmatprep.subr.mxu0 0.0
    %119 = vmatpush2.msra.mxu0 0.0
    %120 = vmatprep.subr.mxu0 0.0
    %121 = vmatpush2.msra.mxu0 0.0
    %122 = vmatprep.subr.mxu0 0.0
    %123 = vmatpush2.msra.mxu0 0.0
    %124 = vmatprep.subr.mxu0 0.0
    %125 = vmatpush2.msra.mxu0 0.0
    %126 = vmatprep.subr.mxu0 0.0
    %127 = vmatpush2.msra.mxu0 0.0
    %128 = vmatprep.mubr.f32.mxu0 0.0
    %129 = vmatmul.mubr.f32.gmra.mxu0 %v58
    %v130 = vpop.f32.mrf.mxu0
    %v131 = vadd.f32 0.0, %v130
    %v132 = vpop.f32.mrf.mxu0
    %133 = vdwg.mxu0
    %v138 = vcombine.high %v29, %v29
    %v140 = vunpack.c.l.s4 1983009808
    %v141 = vunpack.c.0.s8 %v140
    %v142 = vlaneseq
    %v143 = vshrl.u32 %v142, 7
    %v144 = vsub.s32 %v141, %v143
    %v145 = vrot.slane %v29, %v144
    %v147 = vunpack.c.l.s4 1983009808
    %v148 = vunpack.c.0.s8 %v147
    %v149 = vlaneseq
    %v150 = vshrl.u32 %v149, 7
    %v151 = vsub.s32 %v148, %v150
    %v152 = vrot.slane %v138, %v151
    %v153 = vcombine.high %v145, %v145
    %v154 = vcombine.high %v152, %v152
    %v156 = vunpack.c.l.s4 1983009808
    %v157 = vunpack.c.0.s8 %v156
    %v158 = vlaneseq
    %v159 = vshrl.u32 %v158, 7
    %v160 = vsub.s32 %v157, %v159
    %v161 = vrot.slane %v30, %v160
    %v162 = vcombine.high %v31, %v31
    %v164 = vunpack.c.l.s4 1983009808
    %v165 = vunpack.c.0.s8 %v164
    %v166 = vlaneseq
    %v167 = vshrl.u32 %v166, 7
    %v168 = vsub.s32 %v165, %v167
    %v169 = vrot.slane %v31, %v168
    %v171 = vunpack.c.l.s4 1983009808
    %v172 = vunpack.c.0.s8 %v171
    %v173 = vlaneseq
    %v174 = vshrl.u32 %v173, 7
    %v175 = vsub.s32 %v172, %v174
    %v176 = vrot.slane %v162, %v175
    %v177 = vcombine.high %v169, %v169
    %v178 = vcombine.high %v176, %v176
    %v180 = vunpack.c.l.s4 1983009808
    %v181 = vunpack.c.0.s8 %v180
    %v182 = vlaneseq
    %v183 = vshrl.u32 %v182, 7
    %v184 = vsub.s32 %v181, %v183
    %v185 = vrot.slane %v32, %v184
    %v186 = vld [vmem:[%s5] sm:$0x3]
    %v187 = vcombine.low %v145, %v153
    %v188 = vcombine.low %v152, %v154
    %v190 = vunpack.c.l.s4 1983009808
    %v191 = vunpack.c.0.s8 %v190
    %v192 = vlaneseq
    %v193 = vshrl.u32 %v192, 7
    %v194 = vsub.s32 %v191, %v193
    %v195 = vrot.slane %v187, %v194
    %v197 = vunpack.c.l.s4 1983009808
    %v198 = vunpack.c.0.s8 %v197
    %v199 = vlaneseq
    %v200 = vshrl.u32 %v199, 7
    %v201 = vsub.s32 %v198, %v200
    %v202 = vrot.slane %v188, %v201
    %v203 = vcombine.low %v195, %v202
    %v204 = vcombine.low %v161, %v169
    %v205 = vcombine.low %v177, %v176
    %v207 = vunpack.c.l.s4 1983009808
    %v208 = vunpack.c.0.s8 %v207
    %v209 = vlaneseq
    %v210 = vshrl.u32 %v209, 7
    %v211 = vsub.s32 %v208, %v210
    %v212 = vrot.slane %v204, %v211
    %v214 = vunpack.c.l.s4 1983009808
    %v215 = vunpack.c.0.s8 %v214
    %v216 = vlaneseq
    %v217 = vshrl.u32 %v216, 7
    %v218 = vsub.s32 %v215, %v217
    %v219 = vrot.slane %v205, %v218
    %v220 = vcombine.low %v212, %v219
    %v221 = vcombine.low %v178, %v185
    %v223 = vunpack.c.l.s4 1983009808
    %v224 = vunpack.c.0.s8 %v223
    %v225 = vlaneseq
    %v226 = vshrl.u32 %v225, 7
    %v227 = vsub.s32 %v224, %v226
    %v228 = vrot.slane %v221, %v227
    %vm229 = vcmask 15360
    %v230 = vsel %vm229, %v203, 0
    %v232 = vsel %vm229, %v220, 0
    %v234 = vsel %vm229, %v228, 0
    %vm236 = vcmask 1041408
    %v238 = vsel %vm236, %v186, 0
    %240 = vmatprep.subr.mxu0 0.0
    %241 = vmatpush1.msra.mxu0 0.0
    %242 = vmatprep.subr.mxu0 0.0
    %243 = vmatpush1.msra.mxu0 0.0
    %244 = vmatprep.subr.mxu0 0.0
    %245 = vmatpush1.msra.mxu0 0.0
    %246 = vmatprep.subr.mxu0 0.0
    %247 = vmatpush1.msra.mxu0 0.0
    %248 = vmatprep.subr.mxu0 0.0
    %249 = vmatpush1.msra.mxu0 0.0
    %250 = vmatprep.subr.mxu0 0.0
    %251 = vmatpush1.msra.mxu0 0.0
    %252 = vmatprep.subr.mxu0 0.0
    %253 = vmatpush1.msra.mxu0 0.0
    %254 = vmatprep.subr.mxu0 0.0
    %255 = vmatpush1.msra.mxu0 0.0
    %256 = vmatprep.subr.mxu0 0.0
    %257 = vmatpush1.msra.mxu0 0.0
    %258 = vmatprep.subr.mxu0 0.0
    %259 = vmatpush1.msra.mxu0 0.0
    %260 = vmatprep.subr.mxu0 0.0
    %261 = vmatpush1.msra.mxu0 0.0
    %262 = vmatprep.subr.mxu0 0.0
    %263 = vmatpush1.msra.mxu0 0.0
    %264 = vmatprep.subr.mxu0 0.0
    %265 = vmatpush1.msra.mxu0 0.0
    %266 = vmatprep.subr.mxu0 0.0
    %267 = vmatpush1.msra.mxu0 0.0
    %268 = vmatprep.subr.mxu0 0.0
    %269 = vmatpush1.msra.mxu0 0.0
    %270 = vmatprep.subr.mxu0 0.0
    %271 = vmatpush1.msra.mxu0 %v238
    %272 = vmatprep.subr.mxu0 0.0
    %273 = vmatpush2.msra.mxu0 0.0
    %274 = vmatprep.subr.mxu0 0.0
    %275 = vmatpush2.msra.mxu0 0.0
    %276 = vmatprep.subr.mxu0 0.0
    %277 = vmatpush2.msra.mxu0 0.0
    %278 = vmatprep.subr.mxu0 0.0
    %279 = vmatpush2.msra.mxu0 0.0
    %280 = vmatprep.subr.mxu0 0.0
    %281 = vmatpush2.msra.mxu0 0.0
    %282 = vmatprep.subr.mxu0 0.0
    %283 = vmatpush2.msra.mxu0 0.0
    %284 = vmatprep.subr.mxu0 0.0
    %285 = vmatpush2.msra.mxu0 0.0
    %286 = vmatprep.subr.mxu0 0.0
    %287 = vmatpush2.msra.mxu0 0.0
    %288 = vmatprep.subr.mxu0 0.0
    %289 = vmatpush2.msra.mxu0 0.0
    %290 = vmatprep.subr.mxu0 0.0
    %291 = vmatpush2.msra.mxu0 0.0
    %292 = vmatprep.subr.mxu0 0.0
    %293 = vmatpush2.msra.mxu0 0.0
    %294 = vmatprep.subr.mxu0 0.0
    %295 = vmatpush2.msra.mxu0 0.0
    %296 = vmatprep.subr.mxu0 0.0
    %297 = vmatpush2.msra.mxu0 0.0
    %298 = vmatprep.subr.mxu0 0.0
    %299 = vmatpush2.msra.mxu0 0.0
    %300 = vmatprep.subr.mxu0 0.0
    %301 = vmatpush2.msra.mxu0 0.0
    %302 = vmatprep.subr.mxu0 0.0
    %303 = vmatpush2.msra.mxu0 0.0
    %304 = vmatprep.mubr.f32.mxu0 0.0
    %305 = vmatmul.mubr.f32.gmra.mxu0 %v230
    %v306 = vpop.f32.mrf.mxu0
    %v307 = vadd.f32 0.0, %v306
    %v308 = vpop.f32.mrf.mxu0
    %309 = vmatprep.mubr.f32.mxu0 0.0
    %310 = vmatmul.mubr.f32.gmra.mxu0 %v232
    %v311 = vpop.f32.mrf.mxu0
    %v312 = vadd.f32 0.0, %v311
    %v313 = vpop.f32.mrf.mxu0
    %314 = vmatprep.mubr.f32.mxu0 0.0
    %315 = vmatmul.mubr.f32.gmra.mxu0 %v234
    %v316 = vpop.f32.mrf.mxu0
    %v317 = vadd.f32 0.0, %v316
    %v318 = vpop.f32.mrf.mxu0
    %319 = vdwg.mxu0
    %v322 = vunpack.c.l.s4 1966171168
    %v323 = vunpack.c.0.s8 %v322
    %v324 = vlaneseq
    %v325 = vshrl.u32 %v324, 7
    %v326 = vsub.s32 %v323, %v325
    %v327 = vrot.slane %v131, %v326
    %v328 = vcombine.high %v327, %v327
    %v330 = vunpack.c.l.s4 1966171168
    %v331 = vunpack.c.0.s8 %v330
    %v332 = vlaneseq
    %v333 = vshrl.u32 %v332, 7
    %v334 = vsub.s32 %v331, %v333
    %v335 = vrot.slane %v327, %v334
    %v337 = vunpack.c.l.s4 1966171168
    %v338 = vunpack.c.0.s8 %v337
    %v339 = vlaneseq
    %v340 = vshrl.u32 %v339, 7
    %v341 = vsub.s32 %v338, %v340
    %v342 = vrot.slane %v328, %v341
    %v346 = vcombine.high %v307, %v307
    %v348 = vunpack.c.l.s4 1983009808
    %v349 = vunpack.c.0.s8 %v348
    %v350 = vlaneseq
    %v351 = vshrl.u32 %v350, 7
    %v352 = vsub.s32 %v349, %v351
    %v353 = vrot.slane %v307, %v352
    %v355 = vunpack.c.l.s4 1983009808
    %v356 = vunpack.c.0.s8 %v355
    %v357 = vlaneseq
    %v358 = vshrl.u32 %v357, 7
    %v359 = vsub.s32 %v356, %v358
    %v360 = vrot.slane %v346, %v359
    %v361 = vcombine.high %v353, %v353
    %v362 = vcombine.high %v360, %v360
    %v363 = vcombine.high %v312, %v312
    %v365 = vunpack.c.l.s4 1983009808
    %v366 = vunpack.c.0.s8 %v365
    %v367 = vlaneseq
    %v368 = vshrl.u32 %v367, 7
    %v369 = vsub.s32 %v366, %v368
    %v370 = vrot.slane %v312, %v369
    %v372 = vunpack.c.l.s4 1983009808
    %v373 = vunpack.c.0.s8 %v372
    %v374 = vlaneseq
    %v375 = vshrl.u32 %v374, 7
    %v376 = vsub.s32 %v373, %v375
    %v377 = vrot.slane %v363, %v376
    %v378 = vcombine.high %v370, %v370
    %v379 = vcombine.high %v377, %v377
    %v381 = vunpack.c.l.s4 1983009808
    %v382 = vunpack.c.0.s8 %v381
    %v383 = vlaneseq
    %v384 = vshrl.u32 %v383, 7
    %v385 = vsub.s32 %v382, %v384
    %v386 = vrot.slane %v317, %v385
    %v387 = vcombine.high %v386, %v386
    %v388 = vlaneseq
    %v389 = vshrl.u32 %v388, 7
    %v390 = vsub.s32 0, %v389
    %v391 = vrot.slane %v335, %v390
    %v392 = vlaneseq
    %v393 = vshrl.u32 %v392, 7
    %v394 = vsub.s32 0, %v393
    %v395 = vrot.slane %v342, %v394
    %v398 = vcombine.low %v353, %v361
    %v399 = vcombine.low %v360, %v362
    %v401 = vunpack.c.l.s4 1983009808
    %v402 = vunpack.c.0.s8 %v401
    %v403 = vlaneseq
    %v404 = vshrl.u32 %v403, 7
    %v405 = vsub.s32 %v402, %v404
    %v406 = vrot.slane %v398, %v405
    %v408 = vunpack.c.l.s4 1983009808
    %v409 = vunpack.c.0.s8 %v408
    %v410 = vlaneseq
    %v411 = vshrl.u32 %v410, 7
    %v412 = vsub.s32 %v409, %v411
    %v413 = vrot.slane %v399, %v412
    %v414 = vcombine.low %v406, %v413
    %v416 = vunpack.c.l.s4 1983009808
    %v417 = vunpack.c.0.s8 %v416
    %v418 = vlaneseq
    %v419 = vshrl.u32 %v418, 7
    %v420 = vsub.s32 %v417, %v419
    %v421 = vrot.slane %v370, %v420
    %v422 = vcombine.low %v378, %v377
    %v423 = vcombine.low %v379, %v386
    %v425 = vunpack.c.l.s4 1983009808
    %v426 = vunpack.c.0.s8 %v425
    %v427 = vlaneseq
    %v428 = vshrl.u32 %v427, 7
    %v429 = vsub.s32 %v426, %v428
    %v430 = vrot.slane %v422, %v429
    %v432 = vunpack.c.l.s4 1983009808
    %v433 = vunpack.c.0.s8 %v432
    %v434 = vlaneseq
    %v435 = vshrl.u32 %v434, 7
    %v436 = vsub.s32 %v433, %v435
    %v437 = vrot.slane %v423, %v436
    %v438 = vcombine.low %v430, %v437
    %v440 = vunpack.c.l.s4 1983009808
    %v441 = vunpack.c.0.s8 %v440
    %v442 = vlaneseq
    %v443 = vshrl.u32 %v442, 7
    %v444 = vsub.s32 %v441, %v443
    %v445 = vrot.slane %v387, %v444
    %v450 = vadd.f32 %v391, %v414
    %v451 = vadd.f32 %v391, %v421
    %v452 = vadd.f32 %v395, %v438
    %v453 = vadd.f32 %v395, %v445
    %v454 = vtanh.pop %v450
    %v455 = vtanh.pop %v451
    %v456 = vtanh.pop %v452
    %v457 = vtanh.pop %v453
    %v458 = vld [vmem:[%s6] sm:$0x1]
    %v460 = vlaneseq
    %v461 = vshrl.u32 %v460, 7
    %v462 = vsub.s32 0, %v461
    %v463 = vrot.slane %v458, %v462
    %v465 = vmul.f32 %v454, %v463
    %v466 = vmul.f32 %v455, %v463
    %v467 = vmul.f32 %v456, %v463
    %v468 = vmul.f32 %v457, %v463
    %469 = vadd.xlane.f32.xlu0 %v465
    %v470 = vpop.xlane.xlu0 %469
    %v471 = vsel %vm236, %v466, 0.0
    %472 = vadd.xlane.f32.xlu0 %v471
    %v473 = vpop.xlane.xlu0 %472
    %474 = vadd.xlane.f32.xlu0 %v467
    %v475 = vpop.xlane.xlu0 %474
    %v476 = vsel %vm236, %v468, 0.0
    %477 = vadd.xlane.f32.xlu0 %v476
    %v478 = vpop.xlane.xlu0 %477
    %v479 = vld [vmem:[%s3] sm:$0x3]
    %v480 = vlaneseq
    %v481 = vand.u32 %v480, 127
    %v483 = vunpack.c.l.s4 1966171168
    %v484 = vunpack.c.0.s8 %v483
    %v485 = vlaneseq
    %v486 = vshrl.u32 %v485, 7
    %v487 = vsub.s32 %v484, %v486
    %v488 = vrot.slane %v479, %v487
    %v489 = vcombine.high %v488, %v488
    %v491 = vunpack.c.l.s4 1966171168
    %v492 = vunpack.c.0.s8 %v491
    %v493 = vlaneseq
    %v494 = vshrl.u32 %v493, 7
    %v495 = vsub.s32 %v492, %v494
    %v496 = vrot.slane %v488, %v495
    %v498 = vunpack.c.l.s4 1966171168
    %v499 = vunpack.c.0.s8 %v498
    %v500 = vlaneseq
    %v501 = vshrl.u32 %v500, 7
    %v502 = vsub.s32 %v499, %v501
    %v503 = vrot.slane %v489, %v502
    %504 = vset.pattern.permute.xlu0 0
    %505 = vperm.xlu0 %504, %v496
    %v506 = vpop.permute.xlu0 %505
    %v507 = vlaneseq
    %v508 = vshrl.u32 %v507, 7
    %v509 = vsub.s32 0, %v508
    %v510 = vrot.slane %v506, %v509
    %511 = vset.pattern.permute.xlu0 0
    %512 = vperm.xlu0 %511, %v503
    %v513 = vpop.permute.xlu0 %512
    %v514 = vlaneseq
    %v515 = vshrl.u32 %v514, 7
    %v516 = vsub.s32 0, %v515
    %v517 = vrot.slane %v513, %v516
    %vm518 = vcmp.lt.s32.totalorder %v481, %v510
    %vm519 = vcmp.lt.s32.totalorder %v481, %v517
    %v524 = vlaneseq
    %v525 = vshrl.u32 %v524, 7
    %v526 = vsub.s32 %v481, %v525
    %v527 = vrot.slane %v470, %v526
    %v528 = vadd.s32 %v481, 4294967288
    %v529 = vlaneseq
    %v530 = vshrl.u32 %v529, 7
    %v531 = vsub.s32 %v528, %v530
    %v532 = vrot.slane %v473, %v531
    %vm533 = vcmask 130112
    %v534 = vsel %vm533, %v532, %v527
    %v535 = vlaneseq
    %v536 = vshrl.u32 %v535, 7
    %v537 = vsub.s32 %v481, %v536
    %v538 = vrot.slane %v475, %v537
    %v539 = vlaneseq
    %v540 = vshrl.u32 %v539, 7
    %v541 = vsub.s32 %v528, %v540
    %v542 = vrot.slane %v478, %v541
    %v543 = vsel %vm533, %v542, %v538
    %v546 = vsel %vm518, %v534, -1000000.0
    %v547 = vsel %vm519, %v543, -1000000.0
    %vm548 = vcmask 73728
    %v549 = vsel %vm548, %v546, -inf
    %550 = vmax.xlane.f32.xlu0 %v549
    %v551 = vpop.xlane.xlu0 %550
    %v552 = vsel %vm548, %v547, -inf
    %553 = vmax.xlane.f32.xlu0 %v552
    %v554 = vpop.xlane.xlu0 %553
    %v555 = vsub.f32 %v546, %v551
    %v556 = vsub.f32 %v547, %v554
    %v557 = vmul.f32 %v555, 1.442695
    %v558 = vpow.pop %v557
    %v559 = vmul.f32 %v556, 1.442695
    %v560 = vpow.pop %v559
    %v561 = vsel %vm548, %v558, 0.0
    %562 = vadd.xlane.f32.xlu0 %v561
    %v563 = vpop.xlane.xlu0 %562
    %v564 = vsel %vm548, %v560, 0.0
    %565 = vadd.xlane.f32.xlu0 %v564
    %v566 = vpop.xlane.xlu0 %565
    %v567 = vrcp.pop %v563
    %v568 = vrcp.pop %v566
    %v569 = vmul.f32 %v558, %v567
    %v570 = vmul.f32 %v560, %v568
    %vm571 = vcmask 80896
    %v573 = vsel %vm571, %v569, 0
    %v576 = vsel %vm236, %v34, 0
    %578 = vmatprep.subr.mxu0 0.0
    %579 = vmatpush1.msra.mxu0 0.0
    %580 = vmatprep.subr.mxu0 0.0
    %581 = vmatpush1.msra.mxu0 0.0
    %582 = vmatprep.subr.mxu0 0.0
    %583 = vmatpush1.msra.mxu0 0.0
    %584 = vmatprep.subr.mxu0 0.0
    %585 = vmatpush1.msra.mxu0 0.0
    %586 = vmatprep.subr.mxu0 0.0
    %587 = vmatpush1.msra.mxu0 0.0
    %588 = vmatprep.subr.mxu0 0.0
    %589 = vmatpush1.msra.mxu0 0.0
    %590 = vmatprep.subr.mxu0 0.0
    %591 = vmatpush1.msra.mxu0 0.0
    %592 = vmatprep.subr.mxu0 0.0
    %593 = vmatpush1.msra.mxu0 0.0
    %594 = vmatprep.subr.mxu0 0.0
    %595 = vmatpush1.msra.mxu0 0.0
    %596 = vmatprep.subr.mxu0 0.0
    %597 = vmatpush1.msra.mxu0 0.0
    %598 = vmatprep.subr.mxu0 0.0
    %599 = vmatpush1.msra.mxu0 0.0
    %600 = vmatprep.subr.mxu0 0.0
    %601 = vmatpush1.msra.mxu0 0.0
    %602 = vmatprep.subr.mxu0 0.0
    %603 = vmatpush1.msra.mxu0 0.0
    %604 = vmatprep.subr.mxu0 0.0
    %605 = vmatpush1.msra.mxu0 0.0
    %606 = vmatprep.subr.mxu0 0.0
    %607 = vmatpush1.msra.mxu0 %v576
    %608 = vmatprep.subr.mxu0 0.0
    %609 = vmatpush1.msra.mxu0 %v33
    %610 = vmatprep.subr.mxu0 0.0
    %611 = vmatpush2.msra.mxu0 0.0
    %612 = vmatprep.subr.mxu0 0.0
    %613 = vmatpush2.msra.mxu0 0.0
    %614 = vmatprep.subr.mxu0 0.0
    %615 = vmatpush2.msra.mxu0 0.0
    %616 = vmatprep.subr.mxu0 0.0
    %617 = vmatpush2.msra.mxu0 0.0
    %618 = vmatprep.subr.mxu0 0.0
    %619 = vmatpush2.msra.mxu0 0.0
    %620 = vmatprep.subr.mxu0 0.0
    %621 = vmatpush2.msra.mxu0 0.0
    %622 = vmatprep.subr.mxu0 0.0
    %623 = vmatpush2.msra.mxu0 0.0
    %624 = vmatprep.subr.mxu0 0.0
    %625 = vmatpush2.msra.mxu0 0.0
    %626 = vmatprep.subr.mxu0 0.0
    %627 = vmatpush2.msra.mxu0 0.0
    %628 = vmatprep.subr.mxu0 0.0
    %629 = vmatpush2.msra.mxu0 0.0
    %630 = vmatprep.subr.mxu0 0.0
    %631 = vmatpush2.msra.mxu0 0.0
    %632 = vmatprep.subr.mxu0 0.0
    %633 = vmatpush2.msra.mxu0 0.0
    %634 = vmatprep.subr.mxu0 0.0
    %635 = vmatpush2.msra.mxu0 0.0
    %636 = vmatprep.subr.mxu0 0.0
    %637 = vmatpush2.msra.mxu0 0.0
    %638 = vmatprep.subr.mxu0 0.0
    %639 = vmatpush2.msra.mxu0 0.0
    %640 = vmatprep.subr.mxu0 0.0
    %641 = vmatpush2.msra.mxu0 0.0
    %642 = vmatprep.mubr.f32.mxu0 0.0
    %643 = vmatmul.mubr.f32.gmra.mxu0 %v573
    %v644 = vpop.f32.mrf.mxu0
    %v645 = vadd.f32 0.0, %v644
    %v646 = vpop.f32.mrf.mxu0
    %647 = vdwg.mxu0
    %v649 = vsel %vm571, %v570, 0
    %v652 = vsel %vm236, %v36, 0
    %654 = vmatprep.subr.mxu0 0.0
    %655 = vmatpush1.msra.mxu0 0.0
    %656 = vmatprep.subr.mxu0 0.0
    %657 = vmatpush1.msra.mxu0 0.0
    %658 = vmatprep.subr.mxu0 0.0
    %659 = vmatpush1.msra.mxu0 0.0
    %660 = vmatprep.subr.mxu0 0.0
    %661 = vmatpush1.msra.mxu0 0.0
    %662 = vmatprep.subr.mxu0 0.0
    %663 = vmatpush1.msra.mxu0 0.0
    %664 = vmatprep.subr.mxu0 0.0
    %665 = vmatpush1.msra.mxu0 0.0
    %666 = vmatprep.subr.mxu0 0.0
    %667 = vmatpush1.msra.mxu0 0.0
    %668 = vmatprep.subr.mxu0 0.0
    %669 = vmatpush1.msra.mxu0 0.0
    %670 = vmatprep.subr.mxu0 0.0
    %671 = vmatpush1.msra.mxu0 0.0
    %672 = vmatprep.subr.mxu0 0.0
    %673 = vmatpush1.msra.mxu0 0.0
    %674 = vmatprep.subr.mxu0 0.0
    %675 = vmatpush1.msra.mxu0 0.0
    %676 = vmatprep.subr.mxu0 0.0
    %677 = vmatpush1.msra.mxu0 0.0
    %678 = vmatprep.subr.mxu0 0.0
    %679 = vmatpush1.msra.mxu0 0.0
    %680 = vmatprep.subr.mxu0 0.0
    %681 = vmatpush1.msra.mxu0 0.0
    %682 = vmatprep.subr.mxu0 0.0
    %683 = vmatpush1.msra.mxu0 %v652
    %684 = vmatprep.subr.mxu0 0.0
    %685 = vmatpush1.msra.mxu0 %v35
    %686 = vmatprep.subr.mxu0 0.0
    %687 = vmatpush2.msra.mxu0 0.0
    %688 = vmatprep.subr.mxu0 0.0
    %689 = vmatpush2.msra.mxu0 0.0
    %690 = vmatprep.subr.mxu0 0.0
    %691 = vmatpush2.msra.mxu0 0.0
    %692 = vmatprep.subr.mxu0 0.0
    %693 = vmatpush2.msra.mxu0 0.0
    %694 = vmatprep.subr.mxu0 0.0
    %695 = vmatpush2.msra.mxu0 0.0
    %696 = vmatprep.subr.mxu0 0.0
    %697 = vmatpush2.msra.mxu0 0.0
    %698 = vmatprep.subr.mxu0 0.0
    %699 = vmatpush2.msra.mxu0 0.0
    %700 = vmatprep.subr.mxu0 0.0
    %701 = vmatpush2.msra.mxu0 0.0
    %702 = vmatprep.subr.mxu0 0.0
    %703 = vmatpush2.msra.mxu0 0.0
    %704 = vmatprep.subr.mxu0 0.0
    %705 = vmatpush2.msra.mxu0 0.0
    %706 = vmatprep.subr.mxu0 0.0
    %707 = vmatpush2.msra.mxu0 0.0
    %708 = vmatprep.subr.mxu0 0.0
    %709 = vmatpush2.msra.mxu0 0.0
    %710 = vmatprep.subr.mxu0 0.0
    %711 = vmatpush2.msra.mxu0 0.0
    %712 = vmatprep.subr.mxu0 0.0
    %713 = vmatpush2.msra.mxu0 0.0
    %714 = vmatprep.subr.mxu0 0.0
    %715 = vmatpush2.msra.mxu0 0.0
    %716 = vmatprep.subr.mxu0 0.0
    %717 = vmatpush2.msra.mxu0 0.0
    %718 = vmatprep.mubr.f32.mxu0 0.0
    %719 = vmatmul.mubr.f32.gmra.mxu0 %v649
    %v720 = vpop.f32.mrf.mxu0
    %v721 = vadd.f32 0.0, %v720
    %v722 = vpop.f32.mrf.mxu0
    %723 = vdwg.mxu0
    %724 = vst [vmem:[#allocation2] sm:$0x1] %v645
    %725 = vst [vmem:[#allocation2 + $0x1] sm:$0x1] %v721
    // Predicated region
    $region30: #{tpu_custom_call.1} parent=1 // pred_check
      _
    $region31: #{tpu_custom_call.1} parent=1 // pred_check_branch
      %727 = sbr.rel (0) target = $region33
    $region32: #{tpu_custom_call.1} parent=1 // pred_region
      %s729 = ssub.s32 32, 32
      %730 = vsyncadd [#allocation3], %s729
      %s731 = sshll.u32 [#allocation2], 4
      %s732 = int_to_ptr.vmem [resolvable:$true] %s731
      %737 = dma.vmem_to_hbm [thread:$0]  %s732, 32, %s7, [#allocation3], 16, 16, 1
    $region33: #{tpu_custom_call.1} parent=1 // pred_fallthru
      _
    // Predicated region
    $region34: #{tpu_custom_call.1} parent=1 // pred_check
      _
    $region35: #{tpu_custom_call.1} parent=1 // pred_check_branch
      %739 = sbr.rel (0) target = $region37
    $region36: #{tpu_custom_call.1} parent=1 // pred_region
      %740 = dma.done [#allocation3], 32
    $region37: #{tpu_custom_call.1} parent=1 // pred_fallthru
      _
    %741 = vsyncpa [#allocation3], 1

</llo_original>
